<compile_context>
chip_gen: v6e
topology: v6e:2x2x1
jax: 0.10.0
libtpu: 0.0.40
codegen_flags: <defaults>
</compile_context>

<pallas_src>
import functools
import math

import jax
import jax.numpy as jnp
from jax.experimental import pallas as pl
from jax.experimental.pallas import tpu as pltpu


def _round_up(x, m):
    return (x + m - 1) // m * m


def _same_padding(kh, kw, stride, dilation):
    """Exactly the padding Conv2dSame.__init__ computes (ZeroPad2d arg order)."""
    k = dilation * (kw - 1) - stride + 2
    pr = k // 2
    pl_ = pr - 1 if k % 2 == 0 else pr
    k = dilation * (kh - 1) - stride + 1 + 1
    pb = k // 2
    pt = pb - 1 if k % 2 == 0 else pb
    # nn.ZeroPad2d((pl, pr, pb, pt)) takes (left, right, top, bottom):
    pad_left, pad_right, pad_top, pad_bottom = pl_, pr, pb, pt
    return pad_left, pad_right, pad_top, pad_bottom


# ----------------------------- Pallas kernel ---------------------------------
def _conv_fused_kernel(x_ref, w_ref, b_ref, o_ref, xs_ref, *, tap_offsets, cin, l_out):
    # x_ref : (1, Cin, Lin)        bf16 flattened zero-padded input, one sample
    # w_ref : (Cout, KH*KW*Cin)    bf16 weights, contraction ordered (tap, cin)
    # b_ref : (Cout, 1)            f32 conv bias
    # o_ref : (1, Cout, l_out)     f32 output; lane index = h * Wp + w (lane-dense)
    # xs_ref: (KH*KW*Cin, l_out)   bf16 VMEM scratch: in-kernel tap stack
    for t, off in enumerate(tap_offsets):                   # static, fully unrolled
        xs_ref[t * cin:(t + 1) * cin, :] = x_ref[0, :, off:off + l_out]
    # Single MXU matmul for the whole convolution of this sample.
    acc = jnp.dot(w_ref[...], xs_ref[...], preferred_element_type=jnp.float32)
    o_ref[0] = (acc + b_ref[...]).astype(o_ref.dtype)       # (Cout,1) bcast over lanes


# ------------------------------ JAX wrapper -----------------------------------
def conv2d_same_forward(x, weight, bias=None, *, stride=1, dilation=1):
    """x: (N, Cin, H, W) f32; weight: (Cout, Cin, KH, KW); bias: (Cout,) or None."""
    if stride != 1:
        # TODO(synk): stride > 1 needs a strided in-kernel gather of the taps;
        # the flattened-shift decomposition below only holds for stride == 1.
        raise NotImplementedError("Pallas Conv2dSame kernel supports stride=1 only.")

    n, cin, hin, win = x.shape
    cout, cin_w, kh, kw = weight.shape
    assert cin == cin_w, (cin, cin_w)

    pad_l, pad_r, pad_t, pad_b = _same_padding(kh, kw, stride, dilation)
    hp = hin + pad_t + pad_b
    wp = win + pad_l + pad_r
    hout = (hp - dilation * (kh - 1) - 1) // stride + 1
    wout = (wp - dilation * (kw - 1) - 1) // stride + 1

    # Lane-dense flattened output length (row stride = Wp), padded to 128 lanes.
    l_out = _round_up(hout * wp, 128)
    # Per-tap lane offsets in the flattened padded input (stride=1).
    tap_offsets = tuple(
        ikh * dilation * wp + ikw * dilation for ikh in range(kh) for ikw in range(kw)
    )
    # The flattened input must cover the furthest tap window; absorb the extra
    # tail into additional zero rows at the bottom (one pad + free reshape).
    lin_needed = tap_offsets[-1] + l_out
    extra_rows = max(0, math.ceil((lin_needed - hp * wp) / wp))
    lin = (hp + extra_rows) * wp

    xp = jnp.pad(
        x.astype(jnp.bfloat16),
        ((0, 0), (0, 0), (pad_t, pad_b + extra_rows), (pad_l, pad_r)),
    ).reshape(n, cin, lin)

    # (Cout, Cin, KH, KW) -> (Cout, KH, KW, Cin) -> (Cout, KH*KW*Cin):
    # contraction index k = tap * Cin + cin matches the in-kernel tap stack.
    w_flat = (
        jnp.transpose(weight, (0, 2, 3, 1)).reshape(cout, kh * kw * cin).astype(jnp.bfloat16)
    )
    if bias is None:
        bias = jnp.zeros((cout,), jnp.float32)
    b2 = bias.reshape(cout, 1).astype(jnp.float32)

    # Explicit VMEM budget: double-buffered input/output blocks + weights + scratch.
    in_block = cin * lin * 2
    out_block = cout * l_out * 4
    w_bytes = kh * kw * cin * cout * 2 + cout * 4
    scratch_bytes = kh * kw * cin * l_out * 2
    vmem_bytes = min(
        64 * 1024 * 1024,
        max(
            32 * 1024 * 1024,
            4 * (in_block + out_block) + 2 * w_bytes + scratch_bytes + 2 * 1024 * 1024,
        ),
    )

    kernel = functools.partial(
        _conv_fused_kernel, tap_offsets=tap_offsets, cin=cin, l_out=l_out
    )
    out_flat = pl.pallas_call(
        kernel,
        out_shape=jax.ShapeDtypeStruct((n, cout, l_out), jnp.float32),
        grid_spec=pltpu.PrefetchScalarGridSpec(
            num_scalar_prefetch=0,
            grid=(n,),
            in_specs=[
                pl.BlockSpec((1, cin, lin), lambda i: (i, 0, 0)),
                pl.BlockSpec((cout, kh * kw * cin), lambda i: (0, 0)),
                pl.BlockSpec((cout, 1), lambda i: (0, 0)),
            ],
            out_specs=pl.BlockSpec((1, cout, l_out), lambda i: (i, 0, 0)),
            scratch_shapes=[pltpu.VMEM((kh * kw * cin, l_out), jnp.bfloat16)],
        ),
        compiler_params=pltpu.CompilerParams(
            dimension_semantics=("parallel",),
            vmem_limit_bytes=vmem_bytes,
        ),
    )(xp, w_flat, b2)

    # Valid outputs live at flat position h*Wp + w for w < Wout; crop + reshape
    # lands directly in NCHW (no transpose needed).
    out = out_flat[:, :, : hout * wp].reshape(n, cout, hout, wp)[:, :, :, :wout]
    return out


# -------------------------------- main ----------------------------------------
if __name__ == "__main__":
    n, cin, h, w = 2, 4, 16, 16
    cout, kh, kw = 8, 3, 3
    stride, dilation = 1, 1

    key = jax.random.PRNGKey(0)
    k_x, k_w, k_b = jax.random.split(key, 3)
    x = jax.random.normal(k_x, (n, cin, h, w), dtype=jnp.float32)
    weight = 0.1 * jax.random.normal(k_w, (cout, cin, kh, kw), dtype=jnp.float32)
    bias = 0.1 * jax.random.normal(k_b, (cout,), dtype=jnp.float32)

    out = conv2d_same_forward(x, weight, bias, stride=stride, dilation=dilation)
    jax.block_until_ready(out)
    assert out.shape == (n, cout, h, w), out.shape
    assert out.dtype == jnp.float32

    # Sanity check against XLA's conv (bf16 MXU operands -> loose tolerance).
    pad_l, pad_r, pad_t, pad_b = _same_padding(kh, kw, stride, dilation)
    ref = jax.lax.conv_general_dilated(
        x, weight,
        window_strides=(stride, stride),
        padding=((pad_t, pad_b), (pad_l, pad_r)),
        rhs_dilation=(dilation, dilation),
        dimension_numbers=("NCHW", "OIHW", "NCHW"),
    ) + bias[None, :, None, None]
    max_err = float(jnp.max(jnp.abs(out - ref)))
    assert max_err < 5e-2, max_err

    print("KERNEL_OK")
</pallas_src>

<mosaic_0001>
module attributes {stable_mosaic.version = 11 : i64} {
  func.func @_conv_fused_kernel(%arg0: i32, %arg1: memref<1x4x432xbf16, #tpu.memory_space<vmem>>, %arg2: memref<8x36xbf16, #tpu.memory_space<vmem>>, %arg3: memref<8x1xf32, #tpu.memory_space<vmem>>, %arg4: memref<1x8x384xf32, #tpu.memory_space<vmem>>, %arg5: memref<36x384xbf16, #tpu.memory_space<vmem>>) attributes {dimension_semantics = [#tpu.dimension_semantics<parallel>], iteration_bounds = array<i64: 2>, scalar_prefetch = 0 : i64, scratch_operands = 1 : i64, tpu.core_type = #tpu.core_type<tc>, window_params = [{transform_indices = @transform_0, window_bounds = array<i64: 1, 4, 432>}, {pipeline_mode = #tpu.pipeline_mode<synchronous>, transform_indices = @transform_1, window_bounds = array<i64: 8, 36>}, {pipeline_mode = #tpu.pipeline_mode<synchronous>, transform_indices = @transform_2, window_bounds = array<i64: 8, 1>}, {transform_indices = @transform_3, window_bounds = array<i64: 1, 8, 384>}]} {
    %c0 = arith.constant 0 : index
    %c0_0 = arith.constant 0 : index
    %c0_1 = arith.constant 0 : index
    %0 = vector.load %arg1[%c0, %c0_0, %c0_1] : memref<1x4x432xbf16, #tpu.memory_space<vmem>>, vector<1x4x384xbf16>
    %1 = vector.shape_cast %0 : vector<1x4x384xbf16> to vector<4x384xbf16>
    %c0_2 = arith.constant 0 : index
    %c0_3 = arith.constant 0 : index
    %2 = vector.load %arg5[%c0_2, %c0_3] : memref<36x384xbf16, #tpu.memory_space<vmem>>, vector<4x384xbf16>
    tpu.vector_store %arg5[%c0_2, %c0_3], %1 {strides = array<i32>} : memref<36x384xbf16, #tpu.memory_space<vmem>>, vector<4x384xbf16>,
    %c0_4 = arith.constant 0 : index
    %c0_5 = arith.constant 0 : index
    %c1 = arith.constant 1 : index
    %3 = vector.load %arg1[%c0_4, %c0_5, %c1] : memref<1x4x432xbf16, #tpu.memory_space<vmem>>, vector<1x4x384xbf16>
    %4 = vector.shape_cast %3 : vector<1x4x384xbf16> to vector<4x384xbf16>
    %c4 = arith.constant 4 : index
    %c0_6 = arith.constant 0 : index
    %5 = vector.load %arg5[%c4, %c0_6] : memref<36x384xbf16, #tpu.memory_space<vmem>>, vector<4x384xbf16>
    tpu.vector_store %arg5[%c4, %c0_6], %4 {strides = array<i32>} : memref<36x384xbf16, #tpu.memory_space<vmem>>, vector<4x384xbf16>,
    %c0_7 = arith.constant 0 : index
    %c0_8 = arith.constant 0 : index
    %c2 = arith.constant 2 : index
    %6 = vector.load %arg1[%c0_7, %c0_8, %c2] : memref<1x4x432xbf16, #tpu.memory_space<vmem>>, vector<1x4x384xbf16>
    %7 = vector.shape_cast %6 : vector<1x4x384xbf16> to vector<4x384xbf16>
    %c8 = arith.constant 8 : index
    %c0_9 = arith.constant 0 : index
    %8 = vector.load %arg5[%c8, %c0_9] : memref<36x384xbf16, #tpu.memory_space<vmem>>, vector<4x384xbf16>
    tpu.vector_store %arg5[%c8, %c0_9], %7 {strides = array<i32>} : memref<36x384xbf16, #tpu.memory_space<vmem>>, vector<4x384xbf16>,
    %c0_10 = arith.constant 0 : index
    %c0_11 = arith.constant 0 : index
    %c18 = arith.constant 18 : index
    %9 = vector.load %arg1[%c0_10, %c0_11, %c18] : memref<1x4x432xbf16, #tpu.memory_space<vmem>>, vector<1x4x384xbf16>
    %10 = vector.shape_cast %9 : vector<1x4x384xbf16> to vector<4x384xbf16>
    %c12 = arith.constant 12 : index
    %c0_12 = arith.constant 0 : index
    %11 = vector.load %arg5[%c12, %c0_12] : memref<36x384xbf16, #tpu.memory_space<vmem>>, vector<4x384xbf16>
    tpu.vector_store %arg5[%c12, %c0_12], %10 {strides = array<i32>} : memref<36x384xbf16, #tpu.memory_space<vmem>>, vector<4x384xbf16>,
    %c0_13 = arith.constant 0 : index
    %c0_14 = arith.constant 0 : index
    %c19 = arith.constant 19 : index
    %12 = vector.load %arg1[%c0_13, %c0_14, %c19] : memref<1x4x432xbf16, #tpu.memory_space<vmem>>, vector<1x4x384xbf16>
    %13 = vector.shape_cast %12 : vector<1x4x384xbf16> to vector<4x384xbf16>
    %c16 = arith.constant 16 : index
    %c0_15 = arith.constant 0 : index
    %14 = vector.load %arg5[%c16, %c0_15] : memref<36x384xbf16, #tpu.memory_space<vmem>>, vector<4x384xbf16>
    tpu.vector_store %arg5[%c16, %c0_15], %13 {strides = array<i32>} : memref<36x384xbf16, #tpu.memory_space<vmem>>, vector<4x384xbf16>,
    %c0_16 = arith.constant 0 : index
    %c0_17 = arith.constant 0 : index
    %c20 = arith.constant 20 : index
    %15 = vector.load %arg1[%c0_16, %c0_17, %c20] : memref<1x4x432xbf16, #tpu.memory_space<vmem>>, vector<1x4x384xbf16>
    %16 = vector.shape_cast %15 : vector<1x4x384xbf16> to vector<4x384xbf16>
    %c20_18 = arith.constant 20 : index
    %c0_19 = arith.constant 0 : index
    %17 = vector.load %arg5[%c20_18, %c0_19] : memref<36x384xbf16, #tpu.memory_space<vmem>>, vector<4x384xbf16>
    tpu.vector_store %arg5[%c20_18, %c0_19], %16 {strides = array<i32>} : memref<36x384xbf16, #tpu.memory_space<vmem>>, vector<4x384xbf16>,
    %c0_20 = arith.constant 0 : index
    %c0_21 = arith.constant 0 : index
    %c36 = arith.constant 36 : index
    %18 = vector.load %arg1[%c0_20, %c0_21, %c36] : memref<1x4x432xbf16, #tpu.memory_space<vmem>>, vector<1x4x384xbf16>
    %19 = vector.shape_cast %18 : vector<1x4x384xbf16> to vector<4x384xbf16>
    %c24 = arith.constant 24 : index
    %c0_22 = arith.constant 0 : index
    %20 = vector.load %arg5[%c24, %c0_22] : memref<36x384xbf16, #tpu.memory_space<vmem>>, vector<4x384xbf16>
    tpu.vector_store %arg5[%c24, %c0_22], %19 {strides = array<i32>} : memref<36x384xbf16, #tpu.memory_space<vmem>>, vector<4x384xbf16>,
    %c0_23 = arith.constant 0 : index
    %c0_24 = arith.constant 0 : index
    %c37 = arith.constant 37 : index
    %21 = vector.load %arg1[%c0_23, %c0_24, %c37] : memref<1x4x432xbf16, #tpu.memory_space<vmem>>, vector<1x4x384xbf16>
    %22 = vector.shape_cast %21 : vector<1x4x384xbf16> to vector<4x384xbf16>
    %c28 = arith.constant 28 : index
    %c0_25 = arith.constant 0 : index
    %23 = vector.load %arg5[%c28, %c0_25] : memref<36x384xbf16, #tpu.memory_space<vmem>>, vector<4x384xbf16>
    tpu.vector_store %arg5[%c28, %c0_25], %22 {strides = array<i32>} : memref<36x384xbf16, #tpu.memory_space<vmem>>, vector<4x384xbf16>,
    %c0_26 = arith.constant 0 : index
    %c0_27 = arith.constant 0 : index
    %c38 = arith.constant 38 : index
    %24 = vector.load %arg1[%c0_26, %c0_27, %c38] : memref<1x4x432xbf16, #tpu.memory_space<vmem>>, vector<1x4x384xbf16>
    %25 = vector.shape_cast %24 : vector<1x4x384xbf16> to vector<4x384xbf16>
    %c32 = arith.constant 32 : index
    %c0_28 = arith.constant 0 : index
    %26 = vector.load %arg5[%c32, %c0_28] : memref<36x384xbf16, #tpu.memory_space<vmem>>, vector<4x384xbf16>
    tpu.vector_store %arg5[%c32, %c0_28], %25 {strides = array<i32>} : memref<36x384xbf16, #tpu.memory_space<vmem>>, vector<4x384xbf16>,
    %c0_29 = arith.constant 0 : index
    %c0_30 = arith.constant 0 : index
    %27 = vector.load %arg2[%c0_29, %c0_30] : memref<8x36xbf16, #tpu.memory_space<vmem>>, vector<8x36xbf16>
    %c0_31 = arith.constant 0 : index
    %c0_32 = arith.constant 0 : index
    %28 = vector.load %arg5[%c0_31, %c0_32] : memref<36x384xbf16, #tpu.memory_space<vmem>>, vector<36x384xbf16>
    %cst = arith.constant dense<0.000000e+00> : vector<8x384xf32>
    %29 = tpu.matmul %27, %28, %cst {dimension_numbers = #tpu.dot_dimension_numbers<[1], [0], [0], [1], [0, 0, 1, 1], [], []>} : vector<8x36xbf16>, vector<36x384xbf16>, vector<8x384xf32> -> vector<8x384xf32>
    %c0_33 = arith.constant 0 : index
    %c0_34 = arith.constant 0 : index
    %30 = vector.load %arg3[%c0_33, %c0_34] : memref<8x1xf32, #tpu.memory_space<vmem>>, vector<8x1xf32>
    %31 = vector.broadcast %30 : vector<8x1xf32> to vector<8x384xf32>
    %32 = arith.addf %29, %31 : vector<8x384xf32>
    %c0_35 = arith.constant 0 : index
    %c0_36 = arith.constant 0 : index
    %c0_37 = arith.constant 0 : index
    %33 = vector.load %arg4[%c0_35, %c0_36, %c0_37] : memref<1x8x384xf32, #tpu.memory_space<vmem>>, vector<1x8x384xf32>
    %34 = vector.shape_cast %33 : vector<1x8x384xf32> to vector<8x384xf32>
    %35 = vector.shape_cast %32 : vector<8x384xf32> to vector<1x8x384xf32>
    tpu.vector_store %arg4[%c0_35, %c0_36, %c0_37], %35 {strides = array<i32>} : memref<1x8x384xf32, #tpu.memory_space<vmem>>, vector<1x8x384xf32>,
    return
  }
  func.func @transform_0(%arg0: i32) -> (i32, i32, i32) {
    %c0_i32 = arith.constant 0 : i32
    %c0_i32_0 = arith.constant 0 : i32
    %c0_i32_1 = arith.constant 0 : i32
    return %arg0, %c0_i32, %c0_i32_0 : i32, i32, i32
  }
  func.func @transform_1(%arg0: i32) -> (i32, i32) {
    %c0_i32 = arith.constant 0 : i32
    %c0_i32_0 = arith.constant 0 : i32
    %c0_i32_1 = arith.constant 0 : i32
    return %c0_i32, %c0_i32_0 : i32, i32
  }
  func.func @transform_2(%arg0: i32) -> (i32, i32) {
    %c0_i32 = arith.constant 0 : i32
    %c0_i32_0 = arith.constant 0 : i32
    %c0_i32_1 = arith.constant 0 : i32
    return %c0_i32, %c0_i32_0 : i32, i32
  }
  func.func @transform_3(%arg0: i32) -> (i32, i32, i32) {
    %c0_i32 = arith.constant 0 : i32
    %c0_i32_0 = arith.constant 0 : i32
    %c0_i32_1 = arith.constant 0 : i32
    return %arg0, %c0_i32, %c0_i32_0 : i32, i32, i32
  }
}

</mosaic_0001>

<llo_original>
// kernel: tpu_custom_call.1
$region0: #{tpu_custom_call.1}
  #allocation0 [shape = 'u32[]', space=smem, size = 0x4, offset = 0x4, fixed_abs, tag = 'smem constant byte address 0x4 - core index']
  #allocation1 [shape = 'u32[144,128]{1,0:T(1,128)}', space=vmem, size = 0x12000, scoped, tag = 'internal scratch']
  #allocation2 [shape = 'bf16[36,384]{1,0:T(8,128)(2,1)}', space=vmem, size = 0x7800, scoped, tag = 'scratch operand']
  %s0 = inlined_call_operand.hbm [shape: bf16[2,4,432], index: 0, kind: input, shape index: {}]
  %s1 = inlined_call_operand.vmem [shape: bf16[8,36], index: 1, kind: input, shape index: {}]
  %s2 = inlined_call_operand.vmem [shape: f32[8,1], index: 2, kind: input, shape index: {}]
  %s3 = inlined_call_operand.hbm [shape: f32[2,8,384], index: 3, kind: output, shape index: {}]
  %s4 = sld [smem:[#allocation0]]
  $region49: #{tpu_custom_call.1} parent=0
    _
  %s6 = ssub.s32 1, %s4
  %s7 = scalar_select 0, %s6, %s4
  $region1: #{tpu_custom_call.1} parent=0
    #allocation3 [shape = 'u8[8192]{0}', space=vmem, size = 0x2000, scoped, tag = 'input window, operand 0']
    #allocation4 [shape = 's32[2]{0}', space=sflag, size = 0x8, scoped, tag = 'scoped memory for tpu_custom_call.1']
    #allocation5 [shape = 's32[2]{0}', space=sflag, size = 0x8, scoped, tag = 'scoped memory for tpu_custom_call.1']
    #allocation6 [shape = 'u8[24576]{0}', space=vmem, size = 0x6000, scoped, tag = 'output window, operand 0']
    %8 = vsyncpa [#allocation4], 0
    %s9 = scalar_lea.sflag [#allocation4], 1
    %10 = vsyncpa %s9, 0
    %11 = vsyncpa [#allocation5], 0
    %s12 = scalar_lea.sflag [#allocation5], 1
    %13 = vsyncpa %s12, 0
    loop: start=0, step=1, limit=4
    $region2: #{tpu_custom_call.1} parent=1 // loop_pre_header
      _
    $region3: #{tpu_custom_call.1} parent=1 // loop_header
      %s15 = sphi 0, %s19
      %p16 = scmp.ge.s32.totalorder %s15, 4
      %s25 = sphi 0, %s27
      %s28 = sphi 0, %s25
      %s29 = sphi 0, %s28
      %s45 = sphi 0, %s29
      %s49 = sphi 0, %s49
      %s51 = sphi 0, %s49
      %s52 = sphi 0, %s51
      %s66 = sphi 0, %s52
      %s70 = sphi 0, %s70
      %s72 = sphi 0, %s70
      %s73 = sphi 0, %s72
      %s87 = sphi 0, %s73
      %s93 = sphi 0, %s95
      %s96 = sphi 0, %s93
      %s97 = sphi 0, %s96
      %s113 = sphi 0, %s97
    $region4: #{tpu_custom_call.1} parent=1 // loop_header_branch
      %18 = sbr.rel (%p16) target = $region8
    $region5: #{tpu_custom_call.1} parent=1 // loop_body
      %s20 = ssub.s32 %s15, 1
      %s21 = ssub.s32 %s15, 2
      %s22 = sadd.s32 %s15, 1
      %s23 = ssub.s32 %s15, %s22
      %p24 = scmp.eq.s32.totalorder %s23, 0
      %s26 = sadd.s32 %s25, 1
      %s27 = scalar_select %p24, %s25, %s26
      %p30 = pneg %p24
      %p31 = scmp.eq.s32.totalorder %s15, 1
      %p32 = por %p30, %p31
      %p33 = scmp.ne.s32.totalorder %s25, %s28
      %p34 = scmp.eq.s32.totalorder %s15, 0
      %p35 = por %p33, %p34
      %p36 = scmp.ne.s32.totalorder %s25, %s28
      %p37 = scmp.eq.s32.totalorder %s20, 1
      %p38 = por %p36, %p37
      %p39 = scmp.ne.s32.totalorder %s28, %s29
      %p40 = scmp.eq.s32.totalorder %s20, 0
      %p41 = por %p39, %p40
      %p42 = scmp.ne.s32.totalorder %s28, %s29
      %p43 = scmp.eq.s32.totalorder %s21, 1
      %p44 = por %p42, %p43
      %p46 = scmp.ne.s32.totalorder %s29, %s45
      %p47 = scmp.eq.s32.totalorder %s21, 0
      %p48 = por %p46, %p47
      %s50 = sadd.s32 %s49, 1
      %p53 = scmp.eq.s32.totalorder %s15, 1
      %p54 = scmp.ne.s32.totalorder %s49, %s51
      %p55 = scmp.eq.s32.totalorder %s15, 0
      %p56 = por %p54, %p55
      %p57 = scmp.ne.s32.totalorder %s49, %s51
      %p58 = scmp.eq.s32.totalorder %s20, 1
      %p59 = por %p57, %p58
      %p60 = scmp.ne.s32.totalorder %s51, %s52
      %p61 = scmp.eq.s32.totalorder %s20, 0
      %p62 = por %p60, %p61
      %p63 = scmp.ne.s32.totalorder %s51, %s52
      %p64 = scmp.eq.s32.totalorder %s21, 1
      %p65 = por %p63, %p64
      %p67 = scmp.ne.s32.totalorder %s52, %s66
      %p68 = scmp.eq.s32.totalorder %s21, 0
      %p69 = por %p67, %p68
      %s71 = sadd.s32 %s70, 1
      %p74 = scmp.eq.s32.totalorder %s15, 1
      %p75 = scmp.ne.s32.totalorder %s70, %s72
      %p76 = scmp.eq.s32.totalorder %s15, 0
      %p77 = por %p75, %p76
      %p78 = scmp.ne.s32.totalorder %s70, %s72
      %p79 = scmp.eq.s32.totalorder %s20, 1
      %p80 = por %p78, %p79
      %p81 = scmp.ne.s32.totalorder %s72, %s73
      %p82 = scmp.eq.s32.totalorder %s20, 0
      %p83 = por %p81, %p82
      %p84 = scmp.ne.s32.totalorder %s72, %s73
      %p85 = scmp.eq.s32.totalorder %s21, 1
      %p86 = por %p84, %p85
      %p88 = scmp.ne.s32.totalorder %s73, %s87
      %p89 = scmp.eq.s32.totalorder %s21, 0
      %p90 = por %p88, %p89
      %s91 = ssub.s32 %s15, %s22
      %p92 = scmp.eq.s32.totalorder %s91, 0
      %s94 = sadd.s32 %s93, 1
      %s95 = scalar_select %p92, %s93, %s94
      %p98 = pneg %p92
      %p99 = scmp.eq.s32.totalorder %s15, 1
      %p100 = por %p98, %p99
      %p101 = scmp.ne.s32.totalorder %s93, %s96
      %p102 = scmp.eq.s32.totalorder %s15, 0
      %p103 = por %p101, %p102
      %p104 = scmp.ne.s32.totalorder %s93, %s96
      %p105 = scmp.eq.s32.totalorder %s20, 1
      %p106 = por %p104, %p105
      %p107 = scmp.ne.s32.totalorder %s96, %s97
      %p108 = scmp.eq.s32.totalorder %s20, 0
      %p109 = por %p107, %p108
      %p110 = scmp.ne.s32.totalorder %s96, %s97
      %p111 = scmp.eq.s32.totalorder %s21, 1
      %p112 = por %p110, %p111
      %p114 = scmp.ne.s32.totalorder %s97, %s113
      %p115 = scmp.eq.s32.totalorder %s21, 0
      %p116 = por %p114, %p115
      %p117 = scmp.le.s32.totalorder 1, %s15
      %p118 = scmp.lt.s32.totalorder %s15, 3
      %p119 = pnand %p117, %p118
      %p120 = pneg %p119
      // Predicated region
      $region9: #{tpu_custom_call.1} parent=5 // pred_check
        _
      $region10: #{tpu_custom_call.1} parent=5 // pred_check_branch
        %122 = sbr.rel (%p119) target = $region12
      $region11: #{tpu_custom_call.1} parent=5 // pred_region
        %s123 = ssub.s32 %s15, 1
        // Predicated region
        $region13: #{tpu_custom_call.1} parent=11 // pred_check
          %p124 = pneg %p62
        $region14: #{tpu_custom_call.1} parent=11 // pred_check_branch
          %126 = sbr.rel (%p124) target = $region16
        $region15: #{tpu_custom_call.1} parent=11 // pred_region
          _
        $region16: #{tpu_custom_call.1} parent=11 // pred_fallthru
          _
        // Predicated region
        $region17: #{tpu_custom_call.1} parent=11 // pred_check
          %p127 = pneg %p83
        $region18: #{tpu_custom_call.1} parent=11 // pred_check_branch
          %129 = sbr.rel (%p127) target = $region20
        $region19: #{tpu_custom_call.1} parent=11 // pred_region
          _
        $region20: #{tpu_custom_call.1} parent=11 // pred_fallthru
          _
      $region12: #{tpu_custom_call.1} parent=5 // pred_fallthru
        _
      %p130 = scmp.lt.s32.totalorder %s15, 2
      // Predicated region
      $region21: #{tpu_custom_call.1} parent=5 // pred_check
        %p131 = pneg %p130
      $region22: #{tpu_custom_call.1} parent=5 // pred_check_branch
        %133 = sbr.rel (%p131) target = $region24
      $region23: #{tpu_custom_call.1} parent=5 // pred_region
        // Predicated region
        $region25: #{tpu_custom_call.1} parent=23 // pred_check
          %p134 = pneg %p35
        $region26: #{tpu_custom_call.1} parent=23 // pred_check_branch
          %136 = sbr.rel (%p134) target = $region28
        $region27: #{tpu_custom_call.1} parent=23 // pred_region
          %s137 = sand.u32 %s25, 1
          %s138 = scalar_lea.sflag [#allocation4], %s137
          %s139 = sand.u32 %s25, 1
          %s140 = smul.addr %s139, 8
          %s141 = scalar_lea.vmem [#allocation3], %s140
          %s143 = ssub.s32 128, 128
          %144 = vsyncadd %s138, %s143
          %s145 = smul.addr %s15, 4
          %s146 = smul.addr %s145, 32
          %s147 = scalar_lea.hbm %s0, %s146
          %s149 = sshll.u32 %s141, 4
          %s150 = int_to_ptr.vmem [resolvable:$true] %s149
          %152 = dma.hbm_to_vmem [thread:$0]  %s147, 128, %s150, %s138
        $region28: #{tpu_custom_call.1} parent=23 // pred_fallthru
          _
      $region24: #{tpu_custom_call.1} parent=5 // pred_fallthru
        _
      %p153 = scmp.le.s32.totalorder 1, %s15
      %p154 = scmp.lt.s32.totalorder %s15, 3
      %p155 = pnand %p153, %p154
      %p156 = pneg %p155
      // Predicated region
      $region29: #{tpu_custom_call.1} parent=5 // pred_check
        _
      $region30: #{tpu_custom_call.1} parent=5 // pred_check_branch
        %158 = sbr.rel (%p155) target = $region32
      $region31: #{tpu_custom_call.1} parent=5 // pred_region
        %s159 = ssub.s32 %s15, 1
        %s160 = sand.u32 %s28, 1
        %s161 = scalar_lea.sflag [#allocation4], %s160
        %s162 = sand.u32 %s28, 1
        %s163 = smul.addr %s162, 8
        %s164 = scalar_lea.vmem [#allocation3], %s163
        // Predicated region
        $region33: #{tpu_custom_call.1} parent=31 // pred_check
          %p165 = pneg %p41
        $region34: #{tpu_custom_call.1} parent=31 // pred_check_branch
          %167 = sbr.rel (%p165) target = $region36
        $region35: #{tpu_custom_call.1} parent=31 // pred_region
          %168 = dma.done %s161, 128
        $region36: #{tpu_custom_call.1} parent=31 // pred_fallthru
          _
        %s169 = sand.u32 %s28, 1
        %s170 = scalar_lea.sflag [#allocation4], %s169
        %s171 = sand.u32 %s28, 1
        %s172 = smul.addr %s171, 8
        %s173 = scalar_lea.vmem [#allocation3], %s172
        %p174 = pneg %p41
        %p175 = pneg %p38
        %p176 = pneg %p62
        %p177 = pneg %p59
        %p178 = pneg %p83
        %p179 = pneg %p80
        %p180 = pneg %p109
        %p181 = pneg %p106
        %s182 = sand.u32 %s96, 1
        %s183 = scalar_lea.sflag [#allocation5], %s182
        %s184 = sand.u32 %s96, 1
        %s185 = smul.addr %s184, 24
        %s186 = scalar_lea.vmem [#allocation6], %s185
        %v188 = vld [vmem:[%s164] sm:$0x3f]
        %v190 = vcombine.high %v188, %v188
        %v192 = vunpack.c.l.s4 1983009808
        %v193 = vunpack.c.0.s8 %v192
        %v194 = vlaneseq
        %v195 = vshrl.u32 %v194, 7
        %v196 = vsub.s32 %v193, %v195
        %v197 = vrot.slane %v188, %v196
        %v199 = vunpack.c.l.s4 1983009808
        %v200 = vunpack.c.0.s8 %v199
        %v201 = vlaneseq
        %v202 = vshrl.u32 %v201, 7
        %v203 = vsub.s32 %v200, %v202
        %v204 = vrot.slane %v190, %v203
        %207 = vst [vmem:[#allocation2] sm:$0x33] %v197
        %208 = vst [vmem:[#allocation2 + $0x8] sm:$0x3] %v204
        %v209 = vld [vmem:[%s164] sm:$0xff]
        %v211 = vcombine.low %v209, %v209
        %v213 = vunpack.c.l.s4 1983009808
        %v214 = vunpack.c.0.s8 %v213
        %v215 = vlaneseq
        %v216 = vshrl.u32 %v215, 7
        %v217 = vsub.s32 %v214, %v216
        %v218 = vrot.slane %v211, %v217
        %v220 = vunpack.c.l.s4 1983009808
        %v221 = vunpack.c.0.s8 %v220
        %v222 = vlaneseq
        %v223 = vshrl.u32 %v222, 7
        %v224 = vsub.s32 %v221, %v223
        %v225 = vrot.slane %v209, %v224
        %226 = vrot.lane.b32.xlu0 %v218, 127
        %v227 = vpop.permute.xlu0 %226
        %228 = vrot.lane.b32.xlu0 %v225, 127
        %v229 = vpop.permute.xlu0 %228
        %v230 = vrot.slane %v227, 4
        %v231 = vrot.slane %v229, 4
        %vm232 = vcmask 1043456
        %v233 = vsel %vm232, %v230, %v231
        %vm234 = vcmask 1039360
        %v235 = vsel %vm234, %v227, %v233
        %v236 = vsel %vm234, %v229, %v231
        %239 = vst [vmem:[#allocation2] sm:$0xcc] %v235
        %240 = vst [vmem:[#allocation2 + $0x8] sm:$0xc] %v236
        %v241 = vld [vmem:[%s164] sm:$0xff]
        %v243 = vcombine.high %v241, %v241
        %v245 = vunpack.c.l.s4 1983009808
        %v246 = vunpack.c.0.s8 %v245
        %v247 = vlaneseq
        %v248 = vshrl.u32 %v247, 7
        %v249 = vsub.s32 %v246, %v248
        %v250 = vrot.slane %v241, %v249
        %v252 = vunpack.c.l.s4 1983009808
        %v253 = vunpack.c.0.s8 %v252
        %v254 = vlaneseq
        %v255 = vshrl.u32 %v254, 7
        %v256 = vsub.s32 %v253, %v255
        %v257 = vrot.slane %v243, %v256
        %258 = vrot.lane.b32.xlu0 %v250, 126
        %v259 = vpop.permute.xlu0 %258
        %260 = vrot.lane.b32.xlu0 %v257, 126
        %v261 = vpop.permute.xlu0 %260
        %v262 = vrot.slane %v259, 4
        %v263 = vrot.slane %v261, 4
        %v264 = vsel %vm232, %v262, %v263
        %vm265 = vcmask 1031168
        %v266 = vsel %vm265, %v259, %v264
        %v267 = vsel %vm265, %v261, %v263
        %270 = vst [vmem:[#allocation2 + $0xc] sm:$0x33] %v266
        %271 = vst [vmem:[#allocation2 + $0x14] sm:$0x3] %v267
        %v272 = vld [vmem:[%s164] sm:$0xff]
        %v274 = vcombine.low %v272, %v272
        %v276 = vunpack.c.l.s4 1983009808
        %v277 = vunpack.c.0.s8 %v276
        %v278 = vlaneseq
        %v279 = vshrl.u32 %v278, 7
        %v280 = vsub.s32 %v277, %v279
        %v281 = vrot.slane %v274, %v280
        %v283 = vunpack.c.l.s4 1983009808
        %v284 = vunpack.c.0.s8 %v283
        %v285 = vlaneseq
        %v286 = vshrl.u32 %v285, 7
        %v287 = vsub.s32 %v284, %v286
        %v288 = vrot.slane %v272, %v287
        %289 = vrot.lane.b32.xlu0 %v281, 110
        %v290 = vpop.permute.xlu0 %289
        %291 = vrot.lane.b32.xlu0 %v288, 110
        %v292 = vpop.permute.xlu0 %291
        %v293 = vrot.slane %v290, 4
        %v294 = vrot.slane %v292, 4
        %v295 = vsel %vm232, %v293, %v294
        %vm296 = vcmask 900096
        %v297 = vsel %vm296, %v290, %v295
        %v298 = vsel %vm296, %v292, %v294
        %301 = vst [vmem:[#allocation2 + $0xc] sm:$0xcc] %v297
        %302 = vst [vmem:[#allocation2 + $0x14] sm:$0xc] %v298
        %v303 = vld [vmem:[%s164] sm:$0xff]
        %v305 = vcombine.high %v303, %v303
        %v307 = vunpack.c.l.s4 1983009808
        %v308 = vunpack.c.0.s8 %v307
        %v309 = vlaneseq
        %v310 = vshrl.u32 %v309, 7
        %v311 = vsub.s32 %v308, %v310
        %v312 = vrot.slane %v303, %v311
        %v314 = vunpack.c.l.s4 1983009808
        %v315 = vunpack.c.0.s8 %v314
        %v316 = vlaneseq
        %v317 = vshrl.u32 %v316, 7
        %v318 = vsub.s32 %v315, %v317
        %v319 = vrot.slane %v305, %v318
        %320 = vrot.lane.b32.xlu0 %v312, 109
        %v321 = vpop.permute.xlu0 %320
        %322 = vrot.lane.b32.xlu0 %v319, 109
        %v323 = vpop.permute.xlu0 %322
        %v324 = vrot.slane %v321, 4
        %v325 = vrot.slane %v323, 4
        %v326 = vsel %vm232, %v324, %v325
        %vm327 = vcmask 891904
        %v328 = vsel %vm327, %v321, %v326
        %v329 = vsel %vm327, %v323, %v325
        %332 = vst [vmem:[#allocation2 + $0x18] sm:$0x33] %v328
        %333 = vst [vmem:[#allocation2 + $0x20] sm:$0x3] %v329
        %v334 = vld [vmem:[%s164] sm:$0xff]
        %v336 = vcombine.low %v334, %v334
        %v338 = vunpack.c.l.s4 1983009808
        %v339 = vunpack.c.0.s8 %v338
        %v340 = vlaneseq
        %v341 = vshrl.u32 %v340, 7
        %v342 = vsub.s32 %v339, %v341
        %v343 = vrot.slane %v336, %v342
        %v345 = vunpack.c.l.s4 1983009808
        %v346 = vunpack.c.0.s8 %v345
        %v347 = vlaneseq
        %v348 = vshrl.u32 %v347, 7
        %v349 = vsub.s32 %v346, %v348
        %v350 = vrot.slane %v334, %v349
        %351 = vrot.lane.b32.xlu0 %v343, 108
        %v352 = vpop.permute.xlu0 %351
        %353 = vrot.lane.b32.xlu0 %v350, 108
        %v354 = vpop.permute.xlu0 %353
        %v355 = vrot.slane %v352, 4
        %v356 = vrot.slane %v354, 4
        %v357 = vsel %vm232, %v355, %v356
        %vm358 = vcmask 883712
        %v359 = vsel %vm358, %v352, %v357
        %v360 = vsel %vm358, %v354, %v356
        %363 = vst [vmem:[#allocation2 + $0x18] sm:$0xcc] %v359
        %364 = vst [vmem:[#allocation2 + $0x20] sm:$0xc] %v360
        %v365 = vld [vmem:[%s164] sm:$0xff]
        %v367 = vcombine.high %v365, %v365
        %v369 = vunpack.c.l.s4 1983009808
        %v370 = vunpack.c.0.s8 %v369
        %v371 = vlaneseq
        %v372 = vshrl.u32 %v371, 7
        %v373 = vsub.s32 %v370, %v372
        %v374 = vrot.slane %v365, %v373
        %v376 = vunpack.c.l.s4 1983009808
        %v377 = vunpack.c.0.s8 %v376
        %v378 = vlaneseq
        %v379 = vshrl.u32 %v378, 7
        %v380 = vsub.s32 %v377, %v379
        %v381 = vrot.slane %v367, %v380
        %382 = vrot.lane.b32.xlu0 %v374, 92
        %v383 = vpop.permute.xlu0 %382
        %384 = vrot.lane.b32.xlu0 %v381, 92
        %v385 = vpop.permute.xlu0 %384
        %v386 = vrot.slane %v383, 4
        %v387 = vrot.slane %v385, 4
        %v388 = vsel %vm232, %v386, %v387
        %vm389 = vcmask 752640
        %v390 = vsel %vm389, %v383, %v388
        %v391 = vsel %vm389, %v385, %v387
        %394 = vst [vmem:[#allocation2 + $0x24] sm:$0x33] %v390
        %395 = vst [vmem:[#allocation2 + $0x2c] sm:$0x3] %v391
        %v396 = vld [vmem:[%s164] sm:$0xff]
        %v398 = vcombine.low %v396, %v396
        %v400 = vunpack.c.l.s4 1983009808
        %v401 = vunpack.c.0.s8 %v400
        %v402 = vlaneseq
        %v403 = vshrl.u32 %v402, 7
        %v404 = vsub.s32 %v401, %v403
        %v405 = vrot.slane %v398, %v404
        %v407 = vunpack.c.l.s4 1983009808
        %v408 = vunpack.c.0.s8 %v407
        %v409 = vlaneseq
        %v410 = vshrl.u32 %v409, 7
        %v411 = vsub.s32 %v408, %v410
        %v412 = vrot.slane %v396, %v411
        %413 = vrot.lane.b32.xlu0 %v405, 91
        %v414 = vpop.permute.xlu0 %413
        %415 = vrot.lane.b32.xlu0 %v412, 91
        %v416 = vpop.permute.xlu0 %415
        %v417 = vrot.slane %v414, 4
        %v418 = vrot.slane %v416, 4
        %v419 = vsel %vm232, %v417, %v418
        %vm420 = vcmask 744448
        %v421 = vsel %vm420, %v414, %v419
        %v422 = vsel %vm420, %v416, %v418
        %425 = vst [vmem:[#allocation2 + $0x24] sm:$0xcc] %v421
        %426 = vst [vmem:[#allocation2 + $0x2c] sm:$0xc] %v422
        %v427 = vld [vmem:[%s164] sm:$0xff]
        %v429 = vcombine.high %v427, %v427
        %v431 = vunpack.c.l.s4 1983009808
        %v432 = vunpack.c.0.s8 %v431
        %v433 = vlaneseq
        %v434 = vshrl.u32 %v433, 7
        %v435 = vsub.s32 %v432, %v434
        %v436 = vrot.slane %v427, %v435
        %v438 = vunpack.c.l.s4 1983009808
        %v439 = vunpack.c.0.s8 %v438
        %v440 = vlaneseq
        %v441 = vshrl.u32 %v440, 7
        %v442 = vsub.s32 %v439, %v441
        %v443 = vrot.slane %v429, %v442
        %444 = vrot.lane.b32.xlu0 %v436, 90
        %v445 = vpop.permute.xlu0 %444
        %446 = vrot.lane.b32.xlu0 %v443, 90
        %v447 = vpop.permute.xlu0 %446
        %v448 = vrot.slane %v445, 4
        %v449 = vrot.slane %v447, 4
        %v450 = vsel %vm232, %v448, %v449
        %vm451 = vcmask 736256
        %v452 = vsel %vm451, %v445, %v450
        %v453 = vsel %vm451, %v447, %v449
        %456 = vst [vmem:[#allocation2 + $0x30] sm:$0x33] %v452
        %457 = vst [vmem:[#allocation2 + $0x38] sm:$0x3] %v453
        %v458 = vld [vmem:[%s1] sm:$0xf]
        %v459 = vld [vmem:[#allocation2] sm:$0xff]
        %v460 = vld [vmem:[#allocation2 + $0x8] sm:$0xf]
        %v461 = vld [vmem:[#allocation2 + $0xc] sm:$0xff]
        %v462 = vld [vmem:[#allocation2 + $0x14] sm:$0xf]
        %v463 = vld [vmem:[#allocation2 + $0x18] sm:$0xff]
        %v464 = vld [vmem:[#allocation2 + $0x20] sm:$0xf]
        %v465 = vld [vmem:[#allocation2 + $0x24] sm:$0xff]
        %v466 = vld [vmem:[#allocation2 + $0x2c] sm:$0xf]
        %v467 = vld [vmem:[#allocation2 + $0x30] sm:$0x33]
        %v468 = vld [vmem:[#allocation2 + $0x38] sm:$0x3]
        %v469 = vld [vmem:[%s2] sm:$0xff]
        %471 = vset.pattern.permute.xlu0 0
        %472 = vperm.xlu0 %471, %v469
        %v473 = vpop.permute.xlu0 %472
        %v485 = vunpack.c.l.b16 %v459
        %v486 = vunpack.c.h.b16 %v459
        %v487 = vunpack.c.l.b16 %v460
        %v488 = vunpack.c.l.b16 %v461
        %v489 = vunpack.c.h.b16 %v461
        %v490 = vunpack.c.l.b16 %v462
        %v491 = vunpack.c.l.b16 %v463
        %v492 = vunpack.c.h.b16 %v463
        %v493 = vunpack.c.l.b16 %v464
        %v494 = vunpack.c.l.b16 %v465
        %v495 = vunpack.c.h.b16 %v465
        %v496 = vunpack.c.l.b16 %v466
        %v497 = vunpack.c.l.b16 %v467
        %v498 = vunpack.c.h.b16 %v467
        %v499 = vunpack.c.l.b16 %v468
        %v500 = vpack.c.b16 %v488, %v485
        %v501 = vpack.c.b16 %v489, %v486
        %v502 = vpack.c.b16 %v490, %v487
        %v503 = vpack.c.b16 %v494, %v491
        %v504 = vpack.c.b16 %v495, %v492
        %v505 = vpack.c.b16 %v496, %v493
        %v506 = vpack.c.b16 %v497, %v497
        %v507 = vpack.c.b16 %v498, %v498
        %v508 = vpack.c.b16 %v499, %v499
        %vm515 = vcmask 293888
        %v517 = vsel %vm515, %v458, 0
        %vm519 = vcmask 1041408
        %v521 = vsel %vm519, %v506, 0
        %v524 = vsel %vm519, %v507, 0
        %v527 = vsel %vm519, %v508, 0
        %529 = vmatprep.subr.bf16.mxu0 0
        %530 = vmatpush1.bf16.msra.mxu0 0
        %531 = vmatprep.subr.bf16.mxu0 0
        %532 = vmatpush1.bf16.msra.mxu0 0
        %533 = vmatprep.subr.bf16.mxu0 0
        %534 = vmatpush1.bf16.msra.mxu0 0
        %535 = vmatprep.subr.bf16.mxu0 0
        %536 = vmatpush1.bf16.msra.mxu0 0
        %537 = vmatprep.subr.bf16.mxu0 0
        %538 = vmatpush1.bf16.msra.mxu0 0
        %539 = vmatprep.subr.bf16.mxu0 %v524
        %540 = vmatpush1.bf16.msra.mxu0 %v521
        %541 = vmatprep.subr.bf16.mxu0 %v504
        %542 = vmatpush1.bf16.msra.mxu0 %v503
        %543 = vmatprep.subr.bf16.mxu0 %v501
        %544 = vmatpush1.bf16.msra.mxu0 %v500
        %545 = vmatprep.subr.bf16.mxu0 0
        %546 = vmatpush2.bf16.msra.mxu0 0
        %547 = vmatprep.subr.bf16.mxu0 0
        %548 = vmatpush2.bf16.msra.mxu0 0
        %549 = vmatprep.subr.bf16.mxu0 0
        %550 = vmatpush2.bf16.msra.mxu0 0
        %551 = vmatprep.subr.bf16.mxu0 0
        %552 = vmatpush2.bf16.msra.mxu0 0
        %553 = vmatprep.subr.bf16.mxu0 0
        %554 = vmatpush2.bf16.msra.mxu0 0
        %555 = vmatprep.subr.bf16.mxu0 0
        %556 = vmatpush2.bf16.msra.mxu0 0
        %557 = vmatprep.subr.bf16.mxu0 0
        %558 = vmatpush2.bf16.msra.mxu0 0
        %559 = vmatprep.subr.bf16.mxu0 0
        %560 = vmatpush2.bf16.msra.mxu0 0
        %561 = vmatprep.mubr.bf16.mxu0 0
        %562 = vmatmul.mubr.bf16.gmra.mxu0 %v517
        %v563 = vpop.f32.mrf.mxu0
        %v564 = vadd.f32 %v473, %v563
        %v565 = vpop.f32.mrf.mxu0
        %v566 = vadd.f32 %v473, %v565
        %v567 = vpop.f32.mrf.mxu0
        %v568 = vpop.f32.mrf.mxu0
        %569 = vdwg.mxu0
        %570 = vmatprep.subr.bf16.mxu0 0
        %571 = vmatpush1.bf16.msra.mxu0 0
        %572 = vmatprep.subr.bf16.mxu0 0
        %573 = vmatpush1.bf16.msra.mxu0 0
        %574 = vmatprep.subr.bf16.mxu0 0
        %575 = vmatpush1.bf16.msra.mxu0 0
        %576 = vmatprep.subr.bf16.mxu0 0
        %577 = vmatpush1.bf16.msra.mxu0 0
        %578 = vmatprep.subr.bf16.mxu0 0
        %579 = vmatpush1.bf16.msra.mxu0 0
        %580 = vmatprep.subr.bf16.mxu0 0
        %581 = vmatpush1.bf16.msra.mxu0 %v527
        %582 = vmatprep.subr.bf16.mxu0 0
        %583 = vmatpush1.bf16.msra.mxu0 %v505
        %584 = vmatprep.subr.bf16.mxu0 0
        %585 = vmatpush1.bf16.msra.mxu0 %v502
        %586 = vmatprep.subr.bf16.mxu0 0
        %587 = vmatpush2.bf16.msra.mxu0 0
        %588 = vmatprep.subr.bf16.mxu0 0
        %589 = vmatpush2.bf16.msra.mxu0 0
        %590 = vmatprep.subr.bf16.mxu0 0
        %591 = vmatpush2.bf16.msra.mxu0 0
        %592 = vmatprep.subr.bf16.mxu0 0
        %593 = vmatpush2.bf16.msra.mxu0 0
        %594 = vmatprep.subr.bf16.mxu0 0
        %595 = vmatpush2.bf16.msra.mxu0 0
        %596 = vmatprep.subr.bf16.mxu0 0
        %597 = vmatpush2.bf16.msra.mxu0 0
        %598 = vmatprep.subr.bf16.mxu0 0
        %599 = vmatpush2.bf16.msra.mxu0 0
        %600 = vmatprep.subr.bf16.mxu0 0
        %601 = vmatpush2.bf16.msra.mxu0 0
        %602 = vmatprep.mubr.bf16.mxu0 0
        %603 = vmatmul.mubr.bf16.gmra.mxu0 %v517
        %v604 = vpop.f32.mrf.mxu0
        %v605 = vadd.f32 %v473, %v604
        %v606 = vpop.f32.mrf.mxu0
        %v607 = vpop.f32.mrf.mxu0
        %v608 = vpop.f32.mrf.mxu0
        %609 = vdwg.mxu0
        %610 = vst [vmem:[%s186] sm:$0xff] %v564
        %611 = vst [vmem:[%s186 + $0x8] sm:$0xff] %v566
        %612 = vst [vmem:[%s186 + $0x10] sm:$0xff] %v605
        %s613 = sand.u32 %s96, 1
        %s614 = scalar_lea.sflag [#allocation5], %s613
        %s615 = sand.u32 %s96, 1
        %s616 = smul.addr %s615, 24
        %s617 = scalar_lea.vmem [#allocation6], %s616
        // Predicated region
        $region37: #{tpu_custom_call.1} parent=31 // pred_check
          %p618 = pneg %p106
        $region38: #{tpu_custom_call.1} parent=31 // pred_check_branch
          %620 = sbr.rel (%p618) target = $region40
        $region39: #{tpu_custom_call.1} parent=31 // pred_region
          %s622 = ssub.s32 384, 384
          %623 = vsyncadd %s614, %s622
          %s624 = smul.addr %s20, 3
          %s625 = smul.addr %s624, 128
          %s626 = scalar_lea.hbm %s3, %s625
          %s628 = sshll.u32 %s617, 4
          %s629 = int_to_ptr.vmem [resolvable:$true] %s628
          %631 = dma.vmem_to_hbm [thread:$0]  %s629, 384, %s626, %s614
        $region40: #{tpu_custom_call.1} parent=31 // pred_fallthru
          _
      $region32: #{tpu_custom_call.1} parent=5 // pred_fallthru
        _
      %p632 = scmp.le.s32.totalorder 2, %s15
      // Predicated region
      $region41: #{tpu_custom_call.1} parent=5 // pred_check
        %p633 = pneg %p632
      $region42: #{tpu_custom_call.1} parent=5 // pred_check_branch
        %635 = sbr.rel (%p633) target = $region44
      $region43: #{tpu_custom_call.1} parent=5 // pred_region
        %s636 = ssub.s32 %s15, 2
        // Predicated region
        $region45: #{tpu_custom_call.1} parent=43 // pred_check
          %p637 = pneg %p112
        $region46: #{tpu_custom_call.1} parent=43 // pred_check_branch
          %639 = sbr.rel (%p637) target = $region48
        $region47: #{tpu_custom_call.1} parent=43 // pred_region
          %s640 = sand.u32 %s97, 1
          %s641 = scalar_lea.sflag [#allocation5], %s640
          %s642 = sand.u32 %s97, 1
          %s643 = smul.addr %s642, 24
          %s644 = scalar_lea.vmem [#allocation6], %s643
          %645 = dma.done %s641, 384
        $region48: #{tpu_custom_call.1} parent=43 // pred_fallthru
          _
      $region44: #{tpu_custom_call.1} parent=5 // pred_fallthru
        _
    $region6: #{tpu_custom_call.1} parent=1 // loop_footer
      %s19 = sadd.s32 1, %s15
    $region7: #{tpu_custom_call.1} parent=1 // loop_footer_branch
      %14 = sbr.rel target = $region3
    $region8: #{tpu_custom_call.1} parent=1 // loop_exit
      _
    %646 = vsyncpa [#allocation4], 1
    %s647 = scalar_lea.sflag [#allocation4], 1
    %648 = vsyncpa %s647, 1
    %649 = vsyncpa [#allocation5], 1
    %s650 = scalar_lea.sflag [#allocation5], 1
    %651 = vsyncpa %s650, 1

</llo_original>
